<compile_context>
chip_gen: v7x
topology: tpu7x:2x2x1
jax: 0.10.0
libtpu: 0.0.40
codegen_flags: <defaults>
</compile_context>

<pallas_src>
import jax
import jax.numpy as jnp
from jax.experimental import pallas as pl
from jax.experimental.pallas import tpu as pltpu


def _angular_conv_kernel(x_ref, w1_ref, w2_ref, o_ref):
    x = x_ref[0]                                                   # (Cin, T)
    h1 = jnp.dot(w1_ref[...], x,
                 preferred_element_type=jnp.float32)               # (Mid, T)
    h1 = jnp.maximum(h1, 0.2 * h1)                                 # LeakyReLU(0.2)
    h2 = jnp.dot(w2_ref[...], h1,
                 preferred_element_type=jnp.float32)               # (Cout, T)
    h2 = jnp.maximum(h2, 0.2 * h2)                                 # LeakyReLU(0.2)
    o_ref[0] = h2.astype(o_ref.dtype)


def _angular_conv_cm(x, w1, w2, *, tile):
    """x: (b, Cin, HWp) with HWp % tile == 0; w1: (Mid, Cin); w2: (Cout, Mid)."""
    b, cin, hwp = x.shape
    mid = w1.shape[0]
    cout = w2.shape[0]
    assert hwp % tile == 0 and tile % 128 == 0

    # Advisory cost hint for XLA's scheduler around the custom call.
    tokens = b * hwp
    cost = pl.CostEstimate(
        flops=2 * tokens * (cin * mid + mid * cout),
        transcendentals=0,
        bytes_accessed=4 * (tokens * (cin + cout) + cin * mid + mid * cout),
    )

    return pl.pallas_call(
        _angular_conv_kernel,
        out_shape=jax.ShapeDtypeStruct((b, cout, hwp), x.dtype),
        grid_spec=pltpu.PrefetchScalarGridSpec(
            num_scalar_prefetch=0,
            grid=(b, hwp // tile),
            in_specs=[
                pl.BlockSpec((1, cin, tile), lambda bi, ti: (bi, 0, ti)),
                pl.BlockSpec((mid, cin), lambda bi, ti: (0, 0)),
                pl.BlockSpec((cout, mid), lambda bi, ti: (0, 0)),
            ],
            out_specs=pl.BlockSpec((1, cout, tile), lambda bi, ti: (bi, 0, ti)),
        ),
        compiler_params=pltpu.CompilerParams(
            dimension_semantics=("parallel", "parallel"),
            # Explicit budget; small vs. the 16/32 MiB scoped defaults and
            # safe on every generation (v7x has 64 MiB physical VMEM).
            vmem_limit_bytes=32 * 1024 * 1024,
        ),
        cost_estimate=cost,
    )(x, w1, w2)


def _round_up(x, m):
    return (x + m - 1) // m * m


def angular_conv(fm, w1_conv, w2_conv, *, ang_channel, tile_tok=2048):
    """Forward pass matching PyTorch AngularConv.

    fm       : (b, c, n, h, w)  float32  (n = angRes*angRes)
    w1_conv  : (AngChannel, c*n, 1, 1, 1)            PyTorch Conv3d weight
    w2_conv  : (AngChannel*n, AngChannel, 1, 1, 1)   PyTorch Conv3d weight
    returns  : (b, AngChannel, n, h, w)
    """
    b, c, n, h, w = fm.shape
    cin = c * n
    mid = w1_conv.shape[0]
    cout = w2_conv.shape[0]
    hw = h * w

    # Pure reshapes only -- no HBM transposes on activations or weights.
    x = fm.reshape(b, cin, hw)                 # (b, Cin, HW)
    w1 = w1_conv.reshape(mid, cin)             # (Mid, Cin)
    w2 = w2_conv.reshape(cout, mid)            # (Cout, Mid)

    # Lane-dense token tile: multiple of 128, capped at available tokens.
    tile = min(tile_tok, _round_up(hw, 128))
    hw_pad = _round_up(hw, tile)
    if hw_pad != hw:
        x = jnp.pad(x, ((0, 0), (0, 0), (0, hw_pad - hw)))

    out = _angular_conv_cm(x, w1, w2, tile=tile)      # (b, Cout, hw_pad)
    if hw_pad != hw:
        out = out[:, :, :hw]

    # (b, Cout, HW) -> (b, AngChannel, n, h, w): contiguous split, no transpose.
    return out.reshape(b, ang_channel, n, h, w)


def _reference(fm, w1_conv, w2_conv, ang_channel):
    """Plain-JAX reference mirroring the PyTorch semantics."""
    b, c, n, h, w = fm.shape
    a_in = fm.reshape(b, c * n, h * w)                        # (b, Cin, HW)
    W1 = w1_conv.reshape(w1_conv.shape[0], c * n)             # (Mid, Cin)
    W2 = w2_conv.reshape(w2_conv.shape[0], w2_conv.shape[1])  # (Cout, Mid)
    y = jnp.einsum('oi,biP->boP', W1, a_in)
    y = jnp.where(y > 0, y, 0.2 * y)
    z = jnp.einsum('om,bmP->boP', W2, y)
    z = jnp.where(z > 0, z, 0.2 * z)
    return z.reshape(b, ang_channel, n, h, w)


if __name__ == "__main__":
    # Config: ch=4, angRes=2 (n=4), AngChannel=8 -> Cin=16, Mid=8, Cout=32.
    ch, ang_res, ang_channel = 4, 2, 8
    n = ang_res * ang_res
    cin = ch * n                      # 16
    cout = ang_channel * n            # 32

    key = jax.random.PRNGKey(0)
    k1, k2, k3, k4 = jax.random.split(key, 4)

    # Deterministic synthetic conv weights (PyTorch Conv3d weight shapes).
    w1_conv = jax.random.normal(k2, (ang_channel, cin, 1, 1, 1),
                                dtype=jnp.float32) * (1.0 / cin) ** 0.5
    w2_conv = jax.random.normal(k3, (cout, ang_channel, 1, 1, 1),
                                dtype=jnp.float32) * (1.0 / ang_channel) ** 0.5

    # Case 1: HW a multiple of 128 (zero-copy, lane-dense fast path).
    b, h, w = 2, 32, 32
    fm = jax.random.normal(k1, (b, ch, n, h, w), dtype=jnp.float32)
    out = jax.block_until_ready(
        angular_conv(fm, w1_conv, w2_conv, ang_channel=ang_channel))
    ref = _reference(fm, w1_conv, w2_conv, ang_channel)
    assert out.shape == (b, ang_channel, n, h, w), out.shape
    assert jnp.allclose(out, ref, atol=1e-5, rtol=1e-5), "mismatch (aligned)"

    # Case 2: HW = 64 (< 128): exercises the token-padding path.
    fm2 = jax.random.normal(k4, (b, ch, n, 8, 8), dtype=jnp.float32)
    out2 = jax.block_until_ready(
        angular_conv(fm2, w1_conv, w2_conv, ang_channel=ang_channel))
    ref2 = _reference(fm2, w1_conv, w2_conv, ang_channel)
    assert out2.shape == (b, ang_channel, n, 8, 8), out2.shape
    assert jnp.allclose(out2, ref2, atol=1e-5, rtol=1e-5), "mismatch (padded)"

    print("KERNEL_OK")
</pallas_src>

<mosaic_0001>
module attributes {stable_mosaic.version = 11 : i64} {
  func.func @_angular_conv_kernel(%arg0: i32, %arg1: i32, %arg2: memref<1x16x1024xf32, #tpu.memory_space<vmem>>, %arg3: memref<8x16xf32, #tpu.memory_space<vmem>>, %arg4: memref<32x8xf32, #tpu.memory_space<vmem>>, %arg5: memref<1x32x1024xf32, #tpu.memory_space<vmem>>) attributes {dimension_semantics = [#tpu.dimension_semantics<parallel>, #tpu.dimension_semantics<parallel>], iteration_bounds = array<i64: 2, 1>, scalar_prefetch = 0 : i64, scratch_operands = 0 : i64, tpu.core_type = #tpu.core_type<tc>, window_params = [{transform_indices = @transform_0, window_bounds = array<i64: 1, 16, 1024>}, {pipeline_mode = #tpu.pipeline_mode<synchronous>, transform_indices = @transform_1, window_bounds = array<i64: 8, 16>}, {pipeline_mode = #tpu.pipeline_mode<synchronous>, transform_indices = @transform_2, window_bounds = array<i64: 32, 8>}, {transform_indices = @transform_3, window_bounds = array<i64: 1, 32, 1024>}]} {
    %c0 = arith.constant 0 : index
    %c0_0 = arith.constant 0 : index
    %c0_1 = arith.constant 0 : index
    %0 = vector.load %arg2[%c0, %c0_0, %c0_1] : memref<1x16x1024xf32, #tpu.memory_space<vmem>>, vector<1x16x1024xf32>
    %1 = vector.shape_cast %0 : vector<1x16x1024xf32> to vector<16x1024xf32>
    %c0_2 = arith.constant 0 : index
    %c0_3 = arith.constant 0 : index
    %2 = vector.load %arg3[%c0_2, %c0_3] : memref<8x16xf32, #tpu.memory_space<vmem>>, vector<8x16xf32>
    %cst = arith.constant dense<0.000000e+00> : vector<8x1024xf32>
    %3 = tpu.matmul %2, %1, %cst {dimension_numbers = #tpu.dot_dimension_numbers<[1], [0], [0], [1], [0, 0, 1, 1], [], []>} : vector<8x16xf32>, vector<16x1024xf32>, vector<8x1024xf32> -> vector<8x1024xf32>
    %cst_4 = arith.constant 2.000000e-01 : f32
    %4 = vector.broadcast %cst_4 : f32 to vector<8x1024xf32>
    %5 = arith.mulf %4, %3 : vector<8x1024xf32>
    %6 = arith.maximumf %3, %5 : vector<8x1024xf32>
    %c0_5 = arith.constant 0 : index
    %c0_6 = arith.constant 0 : index
    %7 = vector.load %arg4[%c0_5, %c0_6] : memref<32x8xf32, #tpu.memory_space<vmem>>, vector<32x8xf32>
    %cst_7 = arith.constant dense<0.000000e+00> : vector<32x1024xf32>
    %8 = tpu.matmul %7, %6, %cst_7 {dimension_numbers = #tpu.dot_dimension_numbers<[1], [0], [0], [1], [0, 0, 1, 1], [], []>} : vector<32x8xf32>, vector<8x1024xf32>, vector<32x1024xf32> -> vector<32x1024xf32>
    %cst_8 = arith.constant 2.000000e-01 : f32
    %9 = vector.broadcast %cst_8 : f32 to vector<32x1024xf32>
    %10 = arith.mulf %9, %8 : vector<32x1024xf32>
    %11 = arith.maximumf %8, %10 : vector<32x1024xf32>
    %c0_9 = arith.constant 0 : index
    %c0_10 = arith.constant 0 : index
    %c0_11 = arith.constant 0 : index
    %12 = vector.load %arg5[%c0_9, %c0_10, %c0_11] : memref<1x32x1024xf32, #tpu.memory_space<vmem>>, vector<1x32x1024xf32>
    %13 = vector.shape_cast %12 : vector<1x32x1024xf32> to vector<32x1024xf32>
    %14 = vector.shape_cast %11 : vector<32x1024xf32> to vector<1x32x1024xf32>
    tpu.vector_store %arg5[%c0_9, %c0_10, %c0_11], %14 {strides = array<i32>} : memref<1x32x1024xf32, #tpu.memory_space<vmem>>, vector<1x32x1024xf32>,
    return
  }
  func.func @transform_0(%arg0: i32, %arg1: i32) -> (i32, i32, i32) {
    %c0_i32 = arith.constant 0 : i32
    %c0_i32_0 = arith.constant 0 : i32
    return %arg0, %c0_i32, %arg1 : i32, i32, i32
  }
  func.func @transform_1(%arg0: i32, %arg1: i32) -> (i32, i32) {
    %c0_i32 = arith.constant 0 : i32
    %c0_i32_0 = arith.constant 0 : i32
    %c0_i32_1 = arith.constant 0 : i32
    return %c0_i32, %c0_i32_0 : i32, i32
  }
  func.func @transform_2(%arg0: i32, %arg1: i32) -> (i32, i32) {
    %c0_i32 = arith.constant 0 : i32
    %c0_i32_0 = arith.constant 0 : i32
    %c0_i32_1 = arith.constant 0 : i32
    return %c0_i32, %c0_i32_0 : i32, i32
  }
  func.func @transform_3(%arg0: i32, %arg1: i32) -> (i32, i32, i32) {
    %c0_i32 = arith.constant 0 : i32
    %c0_i32_0 = arith.constant 0 : i32
    return %arg0, %c0_i32, %arg1 : i32, i32, i32
  }
}

</mosaic_0001>

<llo_original>
// kernel: tpu_custom_call.1
$region0: #{tpu_custom_call.1}
  #allocation0 [shape = 'u32[]', space=smem, size = 0x4, offset = 0x4, fixed_abs, tag = 'smem constant byte address 0x4 - core index']
  #allocation1 [shape = 'u32[144,128]{1,0:T(1,128)}', space=vmem, size = 0x12000, scoped, tag = 'internal scratch']
  %s0 = inlined_call_operand.hbm [shape: f32[2,16,1024], index: 0, kind: input, shape index: {}]
  %s1 = inlined_call_operand.vmem [shape: f32[8,16], index: 1, kind: input, shape index: {}]
  %s2 = inlined_call_operand.vmem [shape: f32[32,8], index: 2, kind: input, shape index: {}]
  %s3 = inlined_call_operand.hbm [shape: f32[2,32,1024], index: 3, kind: output, shape index: {}]
  %s4 = sld [smem:[#allocation0]]
  $region49: #{tpu_custom_call.1} parent=0
    _
  %s6 = ssub.s32 1, %s4
  %s7 = scalar_select 0, %s6, %s4
  $region1: #{tpu_custom_call.1} parent=0
    #allocation2 [shape = 'u8[131072]{0}', space=vmem, size = 0x20000, scoped, tag = 'input window, operand 0']
    #allocation3 [shape = 's32[2]{0}', space=sflag, size = 0x8, scoped, tag = 'scoped memory for tpu_custom_call.1']
    #allocation4 [shape = 's32[2]{0}', space=sflag, size = 0x8, scoped, tag = 'scoped memory for tpu_custom_call.1']
    #allocation5 [shape = 'u8[262144]{0}', space=vmem, size = 0x40000, scoped, tag = 'output window, operand 0']
    %8 = vsyncpa [#allocation3], 0
    %s9 = scalar_lea.sflag [#allocation3], 1
    %10 = vsyncpa %s9, 0
    %11 = vsyncpa [#allocation4], 0
    %s12 = scalar_lea.sflag [#allocation4], 1
    %13 = vsyncpa %s12, 0
    loop: start=0, step=1, limit=4
    $region2: #{tpu_custom_call.1} parent=1 // loop_pre_header
      _
    $region3: #{tpu_custom_call.1} parent=1 // loop_header
      %s15 = sphi 0, %s19
      %p16 = scmp.ge.s32.totalorder %s15, 4
      %s22 = sphi 0, %s34
      %s23 = sphi 0, %s30
      %s24 = sphi 0, %s22
      %s25 = sphi 0, %s23
      %s26 = sphi 0, %s24
      %s27 = sphi 0, %s25
      %s39 = sphi 0, %s41
      %s42 = sphi 0, %s39
      %s43 = sphi 0, %s42
      %s59 = sphi 0, %s43
      %s63 = sphi 0, %s63
      %s65 = sphi 0, %s63
      %s66 = sphi 0, %s65
      %s80 = sphi 0, %s66
      %s84 = sphi 0, %s84
      %s86 = sphi 0, %s84
      %s87 = sphi 0, %s86
      %s101 = sphi 0, %s87
      %s109 = sphi 0, %s111
      %s112 = sphi 0, %s109
      %s113 = sphi 0, %s112
      %s129 = sphi 0, %s113
    $region4: #{tpu_custom_call.1} parent=1 // loop_header_branch
      %18 = sbr.rel (%p16) target = $region8
    $region5: #{tpu_custom_call.1} parent=1 // loop_body
      %s20 = ssub.s32 %s15, 1
      %s21 = ssub.s32 %s15, 2
      %s28 = sadd.s32 1, %s23
      %p29 = scmp.ge.s32.totalorder %s28, 1
      %s30 = scalar_select %p29, 0, %s28
      %s31 = sadd.s32 1, %s22
      %s32 = scalar_select %p29, %s31, %s22
      %p33 = scmp.ge.s32.totalorder %s32, 2
      %s34 = scalar_select %p33, 0, %s32
      %s35 = ssub.s32 %s22, %s34
      %s36 = ssub.s32 %s23, %s30
      %s37 = sor.u32 %s35, %s36
      %p38 = scmp.eq.s32.totalorder %s37, 0
      %s40 = sadd.s32 %s39, 1
      %s41 = scalar_select %p38, %s39, %s40
      %p44 = pneg %p38
      %p45 = scmp.eq.s32.totalorder %s15, 1
      %p46 = por %p44, %p45
      %p47 = scmp.ne.s32.totalorder %s39, %s42
      %p48 = scmp.eq.s32.totalorder %s15, 0
      %p49 = por %p47, %p48
      %p50 = scmp.ne.s32.totalorder %s39, %s42
      %p51 = scmp.eq.s32.totalorder %s20, 1
      %p52 = por %p50, %p51
      %p53 = scmp.ne.s32.totalorder %s42, %s43
      %p54 = scmp.eq.s32.totalorder %s20, 0
      %p55 = por %p53, %p54
      %p56 = scmp.ne.s32.totalorder %s42, %s43
      %p57 = scmp.eq.s32.totalorder %s21, 1
      %p58 = por %p56, %p57
      %p60 = scmp.ne.s32.totalorder %s43, %s59
      %p61 = scmp.eq.s32.totalorder %s21, 0
      %p62 = por %p60, %p61
      %s64 = sadd.s32 %s63, 1
      %p67 = scmp.eq.s32.totalorder %s15, 1
      %p68 = scmp.ne.s32.totalorder %s63, %s65
      %p69 = scmp.eq.s32.totalorder %s15, 0
      %p70 = por %p68, %p69
      %p71 = scmp.ne.s32.totalorder %s63, %s65
      %p72 = scmp.eq.s32.totalorder %s20, 1
      %p73 = por %p71, %p72
      %p74 = scmp.ne.s32.totalorder %s65, %s66
      %p75 = scmp.eq.s32.totalorder %s20, 0
      %p76 = por %p74, %p75
      %p77 = scmp.ne.s32.totalorder %s65, %s66
      %p78 = scmp.eq.s32.totalorder %s21, 1
      %p79 = por %p77, %p78
      %p81 = scmp.ne.s32.totalorder %s66, %s80
      %p82 = scmp.eq.s32.totalorder %s21, 0
      %p83 = por %p81, %p82
      %s85 = sadd.s32 %s84, 1
      %p88 = scmp.eq.s32.totalorder %s15, 1
      %p89 = scmp.ne.s32.totalorder %s84, %s86
      %p90 = scmp.eq.s32.totalorder %s15, 0
      %p91 = por %p89, %p90
      %p92 = scmp.ne.s32.totalorder %s84, %s86
      %p93 = scmp.eq.s32.totalorder %s20, 1
      %p94 = por %p92, %p93
      %p95 = scmp.ne.s32.totalorder %s86, %s87
      %p96 = scmp.eq.s32.totalorder %s20, 0
      %p97 = por %p95, %p96
      %p98 = scmp.ne.s32.totalorder %s86, %s87
      %p99 = scmp.eq.s32.totalorder %s21, 1
      %p100 = por %p98, %p99
      %p102 = scmp.ne.s32.totalorder %s87, %s101
      %p103 = scmp.eq.s32.totalorder %s21, 0
      %p104 = por %p102, %p103
      %s105 = ssub.s32 %s22, %s34
      %s106 = ssub.s32 %s23, %s30
      %s107 = sor.u32 %s105, %s106
      %p108 = scmp.eq.s32.totalorder %s107, 0
      %s110 = sadd.s32 %s109, 1
      %s111 = scalar_select %p108, %s109, %s110
      %p114 = pneg %p108
      %p115 = scmp.eq.s32.totalorder %s15, 1
      %p116 = por %p114, %p115
      %p117 = scmp.ne.s32.totalorder %s109, %s112
      %p118 = scmp.eq.s32.totalorder %s15, 0
      %p119 = por %p117, %p118
      %p120 = scmp.ne.s32.totalorder %s109, %s112
      %p121 = scmp.eq.s32.totalorder %s20, 1
      %p122 = por %p120, %p121
      %p123 = scmp.ne.s32.totalorder %s112, %s113
      %p124 = scmp.eq.s32.totalorder %s20, 0
      %p125 = por %p123, %p124
      %p126 = scmp.ne.s32.totalorder %s112, %s113
      %p127 = scmp.eq.s32.totalorder %s21, 1
      %p128 = por %p126, %p127
      %p130 = scmp.ne.s32.totalorder %s113, %s129
      %p131 = scmp.eq.s32.totalorder %s21, 0
      %p132 = por %p130, %p131
      %p133 = scmp.le.s32.totalorder 1, %s15
      %p134 = scmp.lt.s32.totalorder %s15, 3
      %p135 = pnand %p133, %p134
      %p136 = pneg %p135
      // Predicated region
      $region9: #{tpu_custom_call.1} parent=5 // pred_check
        _
      $region10: #{tpu_custom_call.1} parent=5 // pred_check_branch
        %138 = sbr.rel (%p135) target = $region12
      $region11: #{tpu_custom_call.1} parent=5 // pred_region
        %s139 = ssub.s32 %s15, 1
        // Predicated region
        $region13: #{tpu_custom_call.1} parent=11 // pred_check
          %p140 = pneg %p76
        $region14: #{tpu_custom_call.1} parent=11 // pred_check_branch
          %142 = sbr.rel (%p140) target = $region16
        $region15: #{tpu_custom_call.1} parent=11 // pred_region
          _
        $region16: #{tpu_custom_call.1} parent=11 // pred_fallthru
          _
        // Predicated region
        $region17: #{tpu_custom_call.1} parent=11 // pred_check
          %p143 = pneg %p97
        $region18: #{tpu_custom_call.1} parent=11 // pred_check_branch
          %145 = sbr.rel (%p143) target = $region20
        $region19: #{tpu_custom_call.1} parent=11 // pred_region
          _
        $region20: #{tpu_custom_call.1} parent=11 // pred_fallthru
          _
      $region12: #{tpu_custom_call.1} parent=5 // pred_fallthru
        _
      %p146 = scmp.lt.s32.totalorder %s15, 2
      // Predicated region
      $region21: #{tpu_custom_call.1} parent=5 // pred_check
        %p147 = pneg %p146
      $region22: #{tpu_custom_call.1} parent=5 // pred_check_branch
        %149 = sbr.rel (%p147) target = $region24
      $region23: #{tpu_custom_call.1} parent=5 // pred_region
        // Predicated region
        $region25: #{tpu_custom_call.1} parent=23 // pred_check
          %p150 = pneg %p49
        $region26: #{tpu_custom_call.1} parent=23 // pred_check_branch
          %152 = sbr.rel (%p150) target = $region28
        $region27: #{tpu_custom_call.1} parent=23 // pred_region
          %s153 = sand.u32 %s39, 1
          %s154 = scalar_lea.sflag [#allocation3], %s153
          %s155 = sand.u32 %s39, 1
          %s156 = smul.addr %s155, 128
          %s157 = scalar_lea.vmem [#allocation2], %s156
          %s158 = smul.u32 8, %s23
          %s160 = ssub.s32 2048, 2048
          %161 = vsyncadd %s154, %s160
          %s162 = smul.addr %s22, 16
          %s163 = sadd.s32 %s158, %s162
          %s164 = smul.addr %s163, 128
          %s165 = scalar_lea.hbm %s0, %s164
          %s166 = sshll.u32 %s157, 4
          %s167 = int_to_ptr.vmem [resolvable:$true] %s166
          %172 = dma.hbm_to_vmem [thread:$0]  %s165, 2048, %s167, %s154, 1024, 1024, 64
        $region28: #{tpu_custom_call.1} parent=23 // pred_fallthru
          _
      $region24: #{tpu_custom_call.1} parent=5 // pred_fallthru
        _
      %p173 = scmp.le.s32.totalorder 1, %s15
      %p174 = scmp.lt.s32.totalorder %s15, 3
      %p175 = pnand %p173, %p174
      %p176 = pneg %p175
      // Predicated region
      $region29: #{tpu_custom_call.1} parent=5 // pred_check
        _
      $region30: #{tpu_custom_call.1} parent=5 // pred_check_branch
        %178 = sbr.rel (%p175) target = $region32
      $region31: #{tpu_custom_call.1} parent=5 // pred_region
        %s179 = ssub.s32 %s15, 1
        %s180 = sand.u32 %s42, 1
        %s181 = scalar_lea.sflag [#allocation3], %s180
        %s182 = sand.u32 %s42, 1
        %s183 = smul.addr %s182, 128
        %s184 = scalar_lea.vmem [#allocation2], %s183
        // Predicated region
        $region33: #{tpu_custom_call.1} parent=31 // pred_check
          %p185 = pneg %p55
        $region34: #{tpu_custom_call.1} parent=31 // pred_check_branch
          %187 = sbr.rel (%p185) target = $region36
        $region35: #{tpu_custom_call.1} parent=31 // pred_region
          %188 = dma.done %s181, 2048
        $region36: #{tpu_custom_call.1} parent=31 // pred_fallthru
          _
        %s189 = sand.u32 %s42, 1
        %s190 = scalar_lea.sflag [#allocation3], %s189
        %s191 = sand.u32 %s42, 1
        %s192 = smul.addr %s191, 128
        %s193 = scalar_lea.vmem [#allocation2], %s192
        %p194 = pneg %p55
        %p195 = pneg %p52
        %p196 = pneg %p76
        %p197 = pneg %p73
        %p198 = pneg %p97
        %p199 = pneg %p94
        %p200 = pneg %p125
        %p201 = pneg %p122
        %s202 = sand.u32 %s112, 1
        %s203 = scalar_lea.sflag [#allocation4], %s202
        %s204 = sand.u32 %s112, 1
        %s205 = smul.addr %s204, 256
        %s206 = scalar_lea.vmem [#allocation5], %s205
        %s207 = smul.u32 8, %s25
        %s208 = smul.u32 8, %s25
        %v209 = vld [vmem:[%s184] sm:$0xff]
        %v210 = vld [vmem:[%s184 + $0x8] sm:$0xff]
        %v211 = vld [vmem:[%s184 + $0x10] sm:$0xff]
        %v212 = vld [vmem:[%s184 + $0x18] sm:$0xff]
        %v213 = vld [vmem:[%s184 + $0x20] sm:$0xff]
        %v214 = vld [vmem:[%s184 + $0x28] sm:$0xff]
        %v215 = vld [vmem:[%s184 + $0x30] sm:$0xff]
        %v216 = vld [vmem:[%s184 + $0x38] sm:$0xff]
        %v217 = vld [vmem:[%s184 + $0x40] sm:$0xff]
        %v218 = vld [vmem:[%s184 + $0x48] sm:$0xff]
        %v219 = vld [vmem:[%s184 + $0x50] sm:$0xff]
        %v220 = vld [vmem:[%s184 + $0x58] sm:$0xff]
        %v221 = vld [vmem:[%s184 + $0x60] sm:$0xff]
        %v222 = vld [vmem:[%s184 + $0x68] sm:$0xff]
        %v223 = vld [vmem:[%s184 + $0x70] sm:$0xff]
        %v224 = vld [vmem:[%s184 + $0x78] sm:$0xff]
        %v225 = vld [vmem:[%s1] sm:$0xff]
        %vm226 = vcmask 130048
        %v228 = vsel %vm226, %v225, 0
        %230 = vmatprep.subr.mxu0 %v210
        %231 = vmatpush1.msra.mxu0 %v209
        %232 = vmatprep.subr.mxu0 %v218
        %233 = vmatpush1.msra.mxu0 %v217
        %234 = vmatprep.subr.mxu0 0.0
        %235 = vmatpush1.msra.mxu0 0.0
        %236 = vmatprep.subr.mxu0 0.0
        %237 = vmatpush1.msra.mxu0 0.0
        %238 = vmatprep.subr.mxu0 0.0
        %239 = vmatpush1.msra.mxu0 0.0
        %240 = vmatprep.subr.mxu0 0.0
        %241 = vmatpush1.msra.mxu0 0.0
        %242 = vmatprep.subr.mxu0 0.0
        %243 = vmatpush1.msra.mxu0 0.0
        %244 = vmatprep.subr.mxu0 0.0
        %245 = vmatpush1.msra.mxu0 0.0
        %246 = vmatprep.subr.mxu0 0.0
        %247 = vmatpush1.msra.mxu0 0.0
        %248 = vmatprep.subr.mxu0 0.0
        %249 = vmatpush1.msra.mxu0 0.0
        %250 = vmatprep.subr.mxu0 0.0
        %251 = vmatpush1.msra.mxu0 0.0
        %252 = vmatprep.subr.mxu0 0.0
        %253 = vmatpush1.msra.mxu0 0.0
        %254 = vmatprep.subr.mxu0 0.0
        %255 = vmatpush1.msra.mxu0 0.0
        %256 = vmatprep.subr.mxu0 0.0
        %257 = vmatpush1.msra.mxu0 0.0
        %258 = vmatprep.subr.mxu0 0.0
        %259 = vmatpush1.msra.mxu0 0.0
        %260 = vmatprep.subr.mxu0 0.0
        %261 = vmatpush1.msra.mxu0 0.0
        %262 = vmatprep.subr.mxu0 0.0
        %263 = vmatpush1.msra.mxu0 0.0
        %264 = vmatprep.subr.mxu0 0.0
        %265 = vmatpush1.msra.mxu0 0.0
        %266 = vmatprep.subr.mxu0 0.0
        %267 = vmatpush1.msra.mxu0 0.0
        %268 = vmatprep.subr.mxu0 0.0
        %269 = vmatpush1.msra.mxu0 0.0
        %270 = vmatprep.subr.mxu0 0.0
        %271 = vmatpush1.msra.mxu0 0.0
        %272 = vmatprep.subr.mxu0 0.0
        %273 = vmatpush1.msra.mxu0 0.0
        %274 = vmatprep.subr.mxu0 0.0
        %275 = vmatpush1.msra.mxu0 0.0
        %276 = vmatprep.subr.mxu0 0.0
        %277 = vmatpush1.msra.mxu0 0.0
        %278 = vmatprep.subr.mxu0 0.0
        %279 = vmatpush1.msra.mxu0 0.0
        %280 = vmatprep.subr.mxu0 0.0
        %281 = vmatpush1.msra.mxu0 0.0
        %282 = vmatprep.subr.mxu0 0.0
        %283 = vmatpush1.msra.mxu0 0.0
        %284 = vmatprep.subr.mxu0 0.0
        %285 = vmatpush1.msra.mxu0 0.0
        %286 = vmatprep.subr.mxu0 0.0
        %287 = vmatpush1.msra.mxu0 0.0
        %288 = vmatprep.subr.mxu0 0.0
        %289 = vmatpush1.msra.mxu0 0.0
        %290 = vmatprep.subr.mxu0 0.0
        %291 = vmatpush1.msra.mxu0 0.0
        %292 = vmatprep.subr.mxu0 0.0
        %293 = vmatpush1.msra.mxu0 0.0
        %294 = vmatprep.mubr.f32.mxu0 0.0
        %295 = vmatmul.mubr.f32.gmra.mrb[0].mxu0 %v228
        %v296 = vpop.f32.mrb[0].mxu0
        %v297 = vadd.f32 0.0, %v296
        %v298 = vpop.f32.mrb[0].mxu0
        %v299 = vadd.f32 0.0, %v298
        %300 = vdwg.mxu0
        %301 = vmatprep.subr.mxu0 %v212
        %302 = vmatpush1.msra.mxu0 %v211
        %303 = vmatprep.subr.mxu0 %v220
        %304 = vmatpush1.msra.mxu0 %v219
        %305 = vmatprep.subr.mxu0 0.0
        %306 = vmatpush1.msra.mxu0 0.0
        %307 = vmatprep.subr.mxu0 0.0
        %308 = vmatpush1.msra.mxu0 0.0
        %309 = vmatprep.subr.mxu0 0.0
        %310 = vmatpush1.msra.mxu0 0.0
        %311 = vmatprep.subr.mxu0 0.0
        %312 = vmatpush1.msra.mxu0 0.0
        %313 = vmatprep.subr.mxu0 0.0
        %314 = vmatpush1.msra.mxu0 0.0
        %315 = vmatprep.subr.mxu0 0.0
        %316 = vmatpush1.msra.mxu0 0.0
        %317 = vmatprep.subr.mxu0 0.0
        %318 = vmatpush1.msra.mxu0 0.0
        %319 = vmatprep.subr.mxu0 0.0
        %320 = vmatpush1.msra.mxu0 0.0
        %321 = vmatprep.subr.mxu0 0.0
        %322 = vmatpush1.msra.mxu0 0.0
        %323 = vmatprep.subr.mxu0 0.0
        %324 = vmatpush1.msra.mxu0 0.0
        %325 = vmatprep.subr.mxu0 0.0
        %326 = vmatpush1.msra.mxu0 0.0
        %327 = vmatprep.subr.mxu0 0.0
        %328 = vmatpush1.msra.mxu0 0.0
        %329 = vmatprep.subr.mxu0 0.0
        %330 = vmatpush1.msra.mxu0 0.0
        %331 = vmatprep.subr.mxu0 0.0
        %332 = vmatpush1.msra.mxu0 0.0
        %333 = vmatprep.subr.mxu0 0.0
        %334 = vmatpush1.msra.mxu0 0.0
        %335 = vmatprep.subr.mxu0 0.0
        %336 = vmatpush1.msra.mxu0 0.0
        %337 = vmatprep.subr.mxu0 0.0
        %338 = vmatpush1.msra.mxu0 0.0
        %339 = vmatprep.subr.mxu0 0.0
        %340 = vmatpush1.msra.mxu0 0.0
        %341 = vmatprep.subr.mxu0 0.0
        %342 = vmatpush1.msra.mxu0 0.0
        %343 = vmatprep.subr.mxu0 0.0
        %344 = vmatpush1.msra.mxu0 0.0
        %345 = vmatprep.subr.mxu0 0.0
        %346 = vmatpush1.msra.mxu0 0.0
        %347 = vmatprep.subr.mxu0 0.0
        %348 = vmatpush1.msra.mxu0 0.0
        %349 = vmatprep.subr.mxu0 0.0
        %350 = vmatpush1.msra.mxu0 0.0
        %351 = vmatprep.subr.mxu0 0.0
        %352 = vmatpush1.msra.mxu0 0.0
        %353 = vmatprep.subr.mxu0 0.0
        %354 = vmatpush1.msra.mxu0 0.0
        %355 = vmatprep.subr.mxu0 0.0
        %356 = vmatpush1.msra.mxu0 0.0
        %357 = vmatprep.subr.mxu0 0.0
        %358 = vmatpush1.msra.mxu0 0.0
        %359 = vmatprep.subr.mxu0 0.0
        %360 = vmatpush1.msra.mxu0 0.0
        %361 = vmatprep.subr.mxu0 0.0
        %362 = vmatpush1.msra.mxu0 0.0
        %363 = vmatprep.subr.mxu0 0.0
        %364 = vmatpush1.msra.mxu0 0.0
        %365 = vmatprep.mubr.f32.mxu0 0.0
        %366 = vmatmul.mubr.f32.gmra.mrb[0].mxu0 %v228
        %v367 = vpop.f32.mrb[0].mxu0
        %v368 = vadd.f32 0.0, %v367
        %v369 = vpop.f32.mrb[0].mxu0
        %v370 = vadd.f32 0.0, %v369
        %371 = vdwg.mxu0
        %372 = vmatprep.subr.mxu0 %v214
        %373 = vmatpush1.msra.mxu0 %v213
        %374 = vmatprep.subr.mxu0 %v222
        %375 = vmatpush1.msra.mxu0 %v221
        %376 = vmatprep.subr.mxu0 0.0
        %377 = vmatpush1.msra.mxu0 0.0
        %378 = vmatprep.subr.mxu0 0.0
        %379 = vmatpush1.msra.mxu0 0.0
        %380 = vmatprep.subr.mxu0 0.0
        %381 = vmatpush1.msra.mxu0 0.0
        %382 = vmatprep.subr.mxu0 0.0
        %383 = vmatpush1.msra.mxu0 0.0
        %384 = vmatprep.subr.mxu0 0.0
        %385 = vmatpush1.msra.mxu0 0.0
        %386 = vmatprep.subr.mxu0 0.0
        %387 = vmatpush1.msra.mxu0 0.0
        %388 = vmatprep.subr.mxu0 0.0
        %389 = vmatpush1.msra.mxu0 0.0
        %390 = vmatprep.subr.mxu0 0.0
        %391 = vmatpush1.msra.mxu0 0.0
        %392 = vmatprep.subr.mxu0 0.0
        %393 = vmatpush1.msra.mxu0 0.0
        %394 = vmatprep.subr.mxu0 0.0
        %395 = vmatpush1.msra.mxu0 0.0
        %396 = vmatprep.subr.mxu0 0.0
        %397 = vmatpush1.msra.mxu0 0.0
        %398 = vmatprep.subr.mxu0 0.0
        %399 = vmatpush1.msra.mxu0 0.0
        %400 = vmatprep.subr.mxu0 0.0
        %401 = vmatpush1.msra.mxu0 0.0
        %402 = vmatprep.subr.mxu0 0.0
        %403 = vmatpush1.msra.mxu0 0.0
        %404 = vmatprep.subr.mxu0 0.0
        %405 = vmatpush1.msra.mxu0 0.0
        %406 = vmatprep.subr.mxu0 0.0
        %407 = vmatpush1.msra.mxu0 0.0
        %408 = vmatprep.subr.mxu0 0.0
        %409 = vmatpush1.msra.mxu0 0.0
        %410 = vmatprep.subr.mxu0 0.0
        %411 = vmatpush1.msra.mxu0 0.0
        %412 = vmatprep.subr.mxu0 0.0
        %413 = vmatpush1.msra.mxu0 0.0
        %414 = vmatprep.subr.mxu0 0.0
        %415 = vmatpush1.msra.mxu0 0.0
        %416 = vmatprep.subr.mxu0 0.0
        %417 = vmatpush1.msra.mxu0 0.0
        %418 = vmatprep.subr.mxu0 0.0
        %419 = vmatpush1.msra.mxu0 0.0
        %420 = vmatprep.subr.mxu0 0.0
        %421 = vmatpush1.msra.mxu0 0.0
        %422 = vmatprep.subr.mxu0 0.0
        %423 = vmatpush1.msra.mxu0 0.0
        %424 = vmatprep.subr.mxu0 0.0
        %425 = vmatpush1.msra.mxu0 0.0
        %426 = vmatprep.subr.mxu0 0.0
        %427 = vmatpush1.msra.mxu0 0.0
        %428 = vmatprep.subr.mxu0 0.0
        %429 = vmatpush1.msra.mxu0 0.0
        %430 = vmatprep.subr.mxu0 0.0
        %431 = vmatpush1.msra.mxu0 0.0
        %432 = vmatprep.subr.mxu0 0.0
        %433 = vmatpush1.msra.mxu0 0.0
        %434 = vmatprep.subr.mxu0 0.0
        %435 = vmatpush1.msra.mxu0 0.0
        %436 = vmatprep.mubr.f32.mxu0 0.0
        %437 = vmatmul.mubr.f32.gmra.mrb[0].mxu0 %v228
        %v438 = vpop.f32.mrb[0].mxu0
        %v439 = vadd.f32 0.0, %v438
        %v440 = vpop.f32.mrb[0].mxu0
        %v441 = vadd.f32 0.0, %v440
        %442 = vdwg.mxu0
        %443 = vmatprep.subr.mxu0 %v216
        %444 = vmatpush1.msra.mxu0 %v215
        %445 = vmatprep.subr.mxu0 %v224
        %446 = vmatpush1.msra.mxu0 %v223
        %447 = vmatprep.subr.mxu0 0.0
        %448 = vmatpush1.msra.mxu0 0.0
        %449 = vmatprep.subr.mxu0 0.0
        %450 = vmatpush1.msra.mxu0 0.0
        %451 = vmatprep.subr.mxu0 0.0
        %452 = vmatpush1.msra.mxu0 0.0
        %453 = vmatprep.subr.mxu0 0.0
        %454 = vmatpush1.msra.mxu0 0.0
        %455 = vmatprep.subr.mxu0 0.0
        %456 = vmatpush1.msra.mxu0 0.0
        %457 = vmatprep.subr.mxu0 0.0
        %458 = vmatpush1.msra.mxu0 0.0
        %459 = vmatprep.subr.mxu0 0.0
        %460 = vmatpush1.msra.mxu0 0.0
        %461 = vmatprep.subr.mxu0 0.0
        %462 = vmatpush1.msra.mxu0 0.0
        %463 = vmatprep.subr.mxu0 0.0
        %464 = vmatpush1.msra.mxu0 0.0
        %465 = vmatprep.subr.mxu0 0.0
        %466 = vmatpush1.msra.mxu0 0.0
        %467 = vmatprep.subr.mxu0 0.0
        %468 = vmatpush1.msra.mxu0 0.0
        %469 = vmatprep.subr.mxu0 0.0
        %470 = vmatpush1.msra.mxu0 0.0
        %471 = vmatprep.subr.mxu0 0.0
        %472 = vmatpush1.msra.mxu0 0.0
        %473 = vmatprep.subr.mxu0 0.0
        %474 = vmatpush1.msra.mxu0 0.0
        %475 = vmatprep.subr.mxu0 0.0
        %476 = vmatpush1.msra.mxu0 0.0
        %477 = vmatprep.subr.mxu0 0.0
        %478 = vmatpush1.msra.mxu0 0.0
        %479 = vmatprep.subr.mxu0 0.0
        %480 = vmatpush1.msra.mxu0 0.0
        %481 = vmatprep.subr.mxu0 0.0
        %482 = vmatpush1.msra.mxu0 0.0
        %483 = vmatprep.subr.mxu0 0.0
        %484 = vmatpush1.msra.mxu0 0.0
        %485 = vmatprep.subr.mxu0 0.0
        %486 = vmatpush1.msra.mxu0 0.0
        %487 = vmatprep.subr.mxu0 0.0
        %488 = vmatpush1.msra.mxu0 0.0
        %489 = vmatprep.subr.mxu0 0.0
        %490 = vmatpush1.msra.mxu0 0.0
        %491 = vmatprep.subr.mxu0 0.0
        %492 = vmatpush1.msra.mxu0 0.0
        %493 = vmatprep.subr.mxu0 0.0
        %494 = vmatpush1.msra.mxu0 0.0
        %495 = vmatprep.subr.mxu0 0.0
        %496 = vmatpush1.msra.mxu0 0.0
        %497 = vmatprep.subr.mxu0 0.0
        %498 = vmatpush1.msra.mxu0 0.0
        %499 = vmatprep.subr.mxu0 0.0
        %500 = vmatpush1.msra.mxu0 0.0
        %501 = vmatprep.subr.mxu0 0.0
        %502 = vmatpush1.msra.mxu0 0.0
        %503 = vmatprep.subr.mxu0 0.0
        %504 = vmatpush1.msra.mxu0 0.0
        %505 = vmatprep.subr.mxu0 0.0
        %506 = vmatpush1.msra.mxu0 0.0
        %507 = vmatprep.mubr.f32.mxu0 0.0
        %508 = vmatmul.mubr.f32.gmra.mrb[0].mxu0 %v228
        %v509 = vpop.f32.mrb[0].mxu0
        %v510 = vadd.f32 0.0, %v509
        %v511 = vpop.f32.mrb[0].mxu0
        %v512 = vadd.f32 0.0, %v511
        %513 = vdwg.mxu0
        %v514 = vmul.f32 %v297, 0.2
        %v515 = vmul.f32 %v299, 0.2
        %v516 = vmul.f32 %v368, 0.2
        %v517 = vmul.f32 %v370, 0.2
        %v518 = vmul.f32 %v439, 0.2
        %v519 = vmul.f32 %v441, 0.2
        %v520 = vmul.f32 %v510, 0.2
        %v521 = vmul.f32 %v512, 0.2
        %v522 = vmax.f32 %v297, %v514
        %v523 = vmax.f32 %v299, %v515
        %v524 = vmax.f32 %v368, %v516
        %v525 = vmax.f32 %v370, %v517
        %v526 = vmax.f32 %v439, %v518
        %v527 = vmax.f32 %v441, %v519
        %v528 = vmax.f32 %v510, %v520
        %v529 = vmax.f32 %v512, %v521
        %v530 = vld [vmem:[%s2] sm:$0xff]
        %v531 = vld [vmem:[%s2 + $0x8] sm:$0xff]
        %v532 = vld [vmem:[%s2 + $0x10] sm:$0xff]
        %v533 = vld [vmem:[%s2 + $0x18] sm:$0xff]
        %vm534 = vcmask 64512
        %v536 = vsel %vm534, %v530, 0
        %v539 = vsel %vm534, %v531, 0
        %v542 = vsel %vm534, %v532, 0
        %v545 = vsel %vm534, %v533, 0
        %547 = vmatprep.subr.mxu0 %v523
        %548 = vmatpush1.msra.mxu0 %v522
        %549 = vmatprep.subr.mxu0 0.0
        %550 = vmatpush1.msra.mxu0 0.0
        %551 = vmatprep.subr.mxu0 0.0
        %552 = vmatpush1.msra.mxu0 0.0
        %553 = vmatprep.subr.mxu0 0.0
        %554 = vmatpush1.msra.mxu0 0.0
        %555 = vmatprep.subr.mxu0 0.0
        %556 = vmatpush1.msra.mxu0 0.0
        %557 = vmatprep.subr.mxu0 0.0
        %558 = vmatpush1.msra.mxu0 0.0
        %559 = vmatprep.subr.mxu0 0.0
        %560 = vmatpush1.msra.mxu0 0.0
        %561 = vmatprep.subr.mxu0 0.0
        %562 = vmatpush1.msra.mxu0 0.0
        %563 = vmatprep.subr.mxu0 0.0
        %564 = vmatpush1.msra.mxu0 0.0
        %565 = vmatprep.subr.mxu0 0.0
        %566 = vmatpush1.msra.mxu0 0.0
        %567 = vmatprep.subr.mxu0 0.0
        %568 = vmatpush1.msra.mxu0 0.0
        %569 = vmatprep.subr.mxu0 0.0
        %570 = vmatpush1.msra.mxu0 0.0
        %571 = vmatprep.subr.mxu0 0.0
        %572 = vmatpush1.msra.mxu0 0.0
        %573 = vmatprep.subr.mxu0 0.0
        %574 = vmatpush1.msra.mxu0 0.0
        %575 = vmatprep.subr.mxu0 0.0
        %576 = vmatpush1.msra.mxu0 0.0
        %577 = vmatprep.subr.mxu0 0.0
        %578 = vmatpush1.msra.mxu0 0.0
        %579 = vmatprep.subr.mxu0 0.0
        %580 = vmatpush1.msra.mxu0 0.0
        %581 = vmatprep.subr.mxu0 0.0
        %582 = vmatpush1.msra.mxu0 0.0
        %583 = vmatprep.subr.mxu0 0.0
        %584 = vmatpush1.msra.mxu0 0.0
        %585 = vmatprep.subr.mxu0 0.0
        %586 = vmatpush1.msra.mxu0 0.0
        %587 = vmatprep.subr.mxu0 0.0
        %588 = vmatpush1.msra.mxu0 0.0
        %589 = vmatprep.subr.mxu0 0.0
        %590 = vmatpush1.msra.mxu0 0.0
        %591 = vmatprep.subr.mxu0 0.0
        %592 = vmatpush1.msra.mxu0 0.0
        %593 = vmatprep.subr.mxu0 0.0
        %594 = vmatpush1.msra.mxu0 0.0
        %595 = vmatprep.subr.mxu0 0.0
        %596 = vmatpush1.msra.mxu0 0.0
        %597 = vmatprep.subr.mxu0 0.0
        %598 = vmatpush1.msra.mxu0 0.0
        %599 = vmatprep.subr.mxu0 0.0
        %600 = vmatpush1.msra.mxu0 0.0
        %601 = vmatprep.subr.mxu0 0.0
        %602 = vmatpush1.msra.mxu0 0.0
        %603 = vmatprep.subr.mxu0 0.0
        %604 = vmatpush1.msra.mxu0 0.0
        %605 = vmatprep.subr.mxu0 0.0
        %606 = vmatpush1.msra.mxu0 0.0
        %607 = vmatprep.subr.mxu0 0.0
        %608 = vmatpush1.msra.mxu0 0.0
        %609 = vmatprep.subr.mxu0 0.0
        %610 = vmatpush1.msra.mxu0 0.0
        %611 = vmatprep.mubr.f32.mxu0 0.0
        %612 = vmatmul.mubr.f32.gmra.mrb[0].mxu0 %v536
        %v613 = vpop.f32.mrb[0].mxu0
        %v614 = vadd.f32 0.0, %v613
        %v615 = vpop.f32.mrb[0].mxu0
        %v616 = vadd.f32 0.0, %v615
        %617 = vmatprep.mubr.f32.mxu0 0.0
        %618 = vmatmul.mubr.f32.gmra.mrb[0].mxu0 %v539
        %v619 = vpop.f32.mrb[0].mxu0
        %v620 = vadd.f32 0.0, %v619
        %v621 = vpop.f32.mrb[0].mxu0
        %v622 = vadd.f32 0.0, %v621
        %623 = vmatprep.mubr.f32.mxu0 0.0
        %624 = vmatmul.mubr.f32.gmra.mrb[0].mxu0 %v542
        %v625 = vpop.f32.mrb[0].mxu0
        %v626 = vadd.f32 0.0, %v625
        %v627 = vpop.f32.mrb[0].mxu0
        %v628 = vadd.f32 0.0, %v627
        %629 = vmatprep.mubr.f32.mxu0 0.0
        %630 = vmatmul.mubr.f32.gmra.mrb[0].mxu0 %v545
        %v631 = vpop.f32.mrb[0].mxu0
        %v632 = vadd.f32 0.0, %v631
        %v633 = vpop.f32.mrb[0].mxu0
        %v634 = vadd.f32 0.0, %v633
        %635 = vdwg.mxu0
        %636 = vmatprep.subr.mxu0 %v525
        %637 = vmatpush1.msra.mxu0 %v524
        %638 = vmatprep.subr.mxu0 0.0
        %639 = vmatpush1.msra.mxu0 0.0
        %640 = vmatprep.subr.mxu0 0.0
        %641 = vmatpush1.msra.mxu0 0.0
        %642 = vmatprep.subr.mxu0 0.0
        %643 = vmatpush1.msra.mxu0 0.0
        %644 = vmatprep.subr.mxu0 0.0
        %645 = vmatpush1.msra.mxu0 0.0
        %646 = vmatprep.subr.mxu0 0.0
        %647 = vmatpush1.msra.mxu0 0.0
        %648 = vmatprep.subr.mxu0 0.0
        %649 = vmatpush1.msra.mxu0 0.0
        %650 = vmatprep.subr.mxu0 0.0
        %651 = vmatpush1.msra.mxu0 0.0
        %652 = vmatprep.subr.mxu0 0.0
        %653 = vmatpush1.msra.mxu0 0.0
        %654 = vmatprep.subr.mxu0 0.0
        %655 = vmatpush1.msra.mxu0 0.0
        %656 = vmatprep.subr.mxu0 0.0
        %657 = vmatpush1.msra.mxu0 0.0
        %658 = vmatprep.subr.mxu0 0.0
        %659 = vmatpush1.msra.mxu0 0.0
        %660 = vmatprep.subr.mxu0 0.0
        %661 = vmatpush1.msra.mxu0 0.0
        %662 = vmatprep.subr.mxu0 0.0
        %663 = vmatpush1.msra.mxu0 0.0
        %664 = vmatprep.subr.mxu0 0.0
        %665 = vmatpush1.msra.mxu0 0.0
        %666 = vmatprep.subr.mxu0 0.0
        %667 = vmatpush1.msra.mxu0 0.0
        %668 = vmatprep.subr.mxu0 0.0
        %669 = vmatpush1.msra.mxu0 0.0
        %670 = vmatprep.subr.mxu0 0.0
        %671 = vmatpush1.msra.mxu0 0.0
        %672 = vmatprep.subr.mxu0 0.0
        %673 = vmatpush1.msra.mxu0 0.0
        %674 = vmatprep.subr.mxu0 0.0
        %675 = vmatpush1.msra.mxu0 0.0
        %676 = vmatprep.subr.mxu0 0.0
        %677 = vmatpush1.msra.mxu0 0.0
        %678 = vmatprep.subr.mxu0 0.0
        %679 = vmatpush1.msra.mxu0 0.0
        %680 = vmatprep.subr.mxu0 0.0
        %681 = vmatpush1.msra.mxu0 0.0
        %682 = vmatprep.subr.mxu0 0.0
        %683 = vmatpush1.msra.mxu0 0.0
        %684 = vmatprep.subr.mxu0 0.0
        %685 = vmatpush1.msra.mxu0 0.0
        %686 = vmatprep.subr.mxu0 0.0
        %687 = vmatpush1.msra.mxu0 0.0
        %688 = vmatprep.subr.mxu0 0.0
        %689 = vmatpush1.msra.mxu0 0.0
        %690 = vmatprep.subr.mxu0 0.0
        %691 = vmatpush1.msra.mxu0 0.0
        %692 = vmatprep.subr.mxu0 0.0
        %693 = vmatpush1.msra.mxu0 0.0
        %694 = vmatprep.subr.mxu0 0.0
        %695 = vmatpush1.msra.mxu0 0.0
        %696 = vmatprep.subr.mxu0 0.0
        %697 = vmatpush1.msra.mxu0 0.0
        %698 = vmatprep.subr.mxu0 0.0
        %699 = vmatpush1.msra.mxu0 0.0
        %700 = vmatprep.mubr.f32.mxu0 0.0
        %701 = vmatmul.mubr.f32.gmra.mrb[0].mxu0 %v536
        %v702 = vpop.f32.mrb[0].mxu0
        %v703 = vadd.f32 0.0, %v702
        %v704 = vpop.f32.mrb[0].mxu0
        %v705 = vadd.f32 0.0, %v704
        %706 = vmatprep.mubr.f32.mxu0 0.0
        %707 = vmatmul.mubr.f32.gmra.mrb[0].mxu0 %v539
        %v708 = vpop.f32.mrb[0].mxu0
        %v709 = vadd.f32 0.0, %v708
        %v710 = vpop.f32.mrb[0].mxu0
        %v711 = vadd.f32 0.0, %v710
        %712 = vmatprep.mubr.f32.mxu0 0.0
        %713 = vmatmul.mubr.f32.gmra.mrb[0].mxu0 %v542
        %v714 = vpop.f32.mrb[0].mxu0
        %v715 = vadd.f32 0.0, %v714
        %v716 = vpop.f32.mrb[0].mxu0
        %v717 = vadd.f32 0.0, %v716
        %718 = vmatprep.mubr.f32.mxu0 0.0
        %719 = vmatmul.mubr.f32.gmra.mrb[0].mxu0 %v545
        %v720 = vpop.f32.mrb[0].mxu0
        %v721 = vadd.f32 0.0, %v720
        %v722 = vpop.f32.mrb[0].mxu0
        %v723 = vadd.f32 0.0, %v722
        %724 = vdwg.mxu0
        %725 = vmatprep.subr.mxu0 %v527
        %726 = vmatpush1.msra.mxu0 %v526
        %727 = vmatprep.subr.mxu0 0.0
        %728 = vmatpush1.msra.mxu0 0.0
        %729 = vmatprep.subr.mxu0 0.0
        %730 = vmatpush1.msra.mxu0 0.0
        %731 = vmatprep.subr.mxu0 0.0
        %732 = vmatpush1.msra.mxu0 0.0
        %733 = vmatprep.subr.mxu0 0.0
        %734 = vmatpush1.msra.mxu0 0.0
        %735 = vmatprep.subr.mxu0 0.0
        %736 = vmatpush1.msra.mxu0 0.0
        %737 = vmatprep.subr.mxu0 0.0
        %738 = vmatpush1.msra.mxu0 0.0
        %739 = vmatprep.subr.mxu0 0.0
        %740 = vmatpush1.msra.mxu0 0.0
        %741 = vmatprep.subr.mxu0 0.0
        %742 = vmatpush1.msra.mxu0 0.0
        %743 = vmatprep.subr.mxu0 0.0
        %744 = vmatpush1.msra.mxu0 0.0
        %745 = vmatprep.subr.mxu0 0.0
        %746 = vmatpush1.msra.mxu0 0.0
        %747 = vmatprep.subr.mxu0 0.0
        %748 = vmatpush1.msra.mxu0 0.0
        %749 = vmatprep.subr.mxu0 0.0
        %750 = vmatpush1.msra.mxu0 0.0
        %751 = vmatprep.subr.mxu0 0.0
        %752 = vmatpush1.msra.mxu0 0.0
        %753 = vmatprep.subr.mxu0 0.0
        %754 = vmatpush1.msra.mxu0 0.0
        %755 = vmatprep.subr.mxu0 0.0
        %756 = vmatpush1.msra.mxu0 0.0
        %757 = vmatprep.subr.mxu0 0.0
        %758 = vmatpush1.msra.mxu0 0.0
        %759 = vmatprep.subr.mxu0 0.0
        %760 = vmatpush1.msra.mxu0 0.0
        %761 = vmatprep.subr.mxu0 0.0
        %762 = vmatpush1.msra.mxu0 0.0
        %763 = vmatprep.subr.mxu0 0.0
        %764 = vmatpush1.msra.mxu0 0.0
        %765 = vmatprep.subr.mxu0 0.0
        %766 = vmatpush1.msra.mxu0 0.0
        %767 = vmatprep.subr.mxu0 0.0
        %768 = vmatpush1.msra.mxu0 0.0
        %769 = vmatprep.subr.mxu0 0.0
        %770 = vmatpush1.msra.mxu0 0.0
        %771 = vmatprep.subr.mxu0 0.0
        %772 = vmatpush1.msra.mxu0 0.0
        %773 = vmatprep.subr.mxu0 0.0
        %774 = vmatpush1.msra.mxu0 0.0
        %775 = vmatprep.subr.mxu0 0.0
        %776 = vmatpush1.msra.mxu0 0.0
        %777 = vmatprep.subr.mxu0 0.0
        %778 = vmatpush1.msra.mxu0 0.0
        %779 = vmatprep.subr.mxu0 0.0
        %780 = vmatpush1.msra.mxu0 0.0
        %781 = vmatprep.subr.mxu0 0.0
        %782 = vmatpush1.msra.mxu0 0.0
        %783 = vmatprep.subr.mxu0 0.0
        %784 = vmatpush1.msra.mxu0 0.0
        %785 = vmatprep.subr.mxu0 0.0
        %786 = vmatpush1.msra.mxu0 0.0
        %787 = vmatprep.subr.mxu0 0.0
        %788 = vmatpush1.msra.mxu0 0.0
        %789 = vmatprep.mubr.f32.mxu0 0.0
        %790 = vmatmul.mubr.f32.gmra.mrb[0].mxu0 %v536
        %v791 = vpop.f32.mrb[0].mxu0
        %v792 = vadd.f32 0.0, %v791
        %v793 = vpop.f32.mrb[0].mxu0
        %v794 = vadd.f32 0.0, %v793
        %795 = vmatprep.mubr.f32.mxu0 0.0
        %796 = vmatmul.mubr.f32.gmra.mrb[0].mxu0 %v539
        %v797 = vpop.f32.mrb[0].mxu0
        %v798 = vadd.f32 0.0, %v797
        %v799 = vpop.f32.mrb[0].mxu0
        %v800 = vadd.f32 0.0, %v799
        %801 = vmatprep.mubr.f32.mxu0 0.0
        %802 = vmatmul.mubr.f32.gmra.mrb[0].mxu0 %v542
        %v803 = vpop.f32.mrb[0].mxu0
        %v804 = vadd.f32 0.0, %v803
        %v805 = vpop.f32.mrb[0].mxu0
        %v806 = vadd.f32 0.0, %v805
        %807 = vmatprep.mubr.f32.mxu0 0.0
        %808 = vmatmul.mubr.f32.gmra.mrb[0].mxu0 %v545
        %v809 = vpop.f32.mrb[0].mxu0
        %v810 = vadd.f32 0.0, %v809
        %v811 = vpop.f32.mrb[0].mxu0
        %v812 = vadd.f32 0.0, %v811
        %813 = vdwg.mxu0
        %814 = vmatprep.subr.mxu0 %v529
        %815 = vmatpush1.msra.mxu0 %v528
        %816 = vmatprep.subr.mxu0 0.0
        %817 = vmatpush1.msra.mxu0 0.0
        %818 = vmatprep.subr.mxu0 0.0
        %819 = vmatpush1.msra.mxu0 0.0
        %820 = vmatprep.subr.mxu0 0.0
        %821 = vmatpush1.msra.mxu0 0.0
        %822 = vmatprep.subr.mxu0 0.0
        %823 = vmatpush1.msra.mxu0 0.0
        %824 = vmatprep.subr.mxu0 0.0
        %825 = vmatpush1.msra.mxu0 0.0
        %826 = vmatprep.subr.mxu0 0.0
        %827 = vmatpush1.msra.mxu0 0.0
        %828 = vmatprep.subr.mxu0 0.0
        %829 = vmatpush1.msra.mxu0 0.0
        %830 = vmatprep.subr.mxu0 0.0
        %831 = vmatpush1.msra.mxu0 0.0
        %832 = vmatprep.subr.mxu0 0.0
        %833 = vmatpush1.msra.mxu0 0.0
        %834 = vmatprep.subr.mxu0 0.0
        %835 = vmatpush1.msra.mxu0 0.0
        %836 = vmatprep.subr.mxu0 0.0
        %837 = vmatpush1.msra.mxu0 0.0
        %838 = vmatprep.subr.mxu0 0.0
        %839 = vmatpush1.msra.mxu0 0.0
        %840 = vmatprep.subr.mxu0 0.0
        %841 = vmatpush1.msra.mxu0 0.0
        %842 = vmatprep.subr.mxu0 0.0
        %843 = vmatpush1.msra.mxu0 0.0
        %844 = vmatprep.subr.mxu0 0.0
        %845 = vmatpush1.msra.mxu0 0.0
        %846 = vmatprep.subr.mxu0 0.0
        %847 = vmatpush1.msra.mxu0 0.0
        %848 = vmatprep.subr.mxu0 0.0
        %849 = vmatpush1.msra.mxu0 0.0
        %850 = vmatprep.subr.mxu0 0.0
        %851 = vmatpush1.msra.mxu0 0.0
        %852 = vmatprep.subr.mxu0 0.0
        %853 = vmatpush1.msra.mxu0 0.0
        %854 = vmatprep.subr.mxu0 0.0
        %855 = vmatpush1.msra.mxu0 0.0
        %856 = vmatprep.subr.mxu0 0.0
        %857 = vmatpush1.msra.mxu0 0.0
        %858 = vmatprep.subr.mxu0 0.0
        %859 = vmatpush1.msra.mxu0 0.0
        %860 = vmatprep.subr.mxu0 0.0
        %861 = vmatpush1.msra.mxu0 0.0
        %862 = vmatprep.subr.mxu0 0.0
        %863 = vmatpush1.msra.mxu0 0.0
        %864 = vmatprep.subr.mxu0 0.0
        %865 = vmatpush1.msra.mxu0 0.0
        %866 = vmatprep.subr.mxu0 0.0
        %867 = vmatpush1.msra.mxu0 0.0
        %868 = vmatprep.subr.mxu0 0.0
        %869 = vmatpush1.msra.mxu0 0.0
        %870 = vmatprep.subr.mxu0 0.0
        %871 = vmatpush1.msra.mxu0 0.0
        %872 = vmatprep.subr.mxu0 0.0
        %873 = vmatpush1.msra.mxu0 0.0
        %874 = vmatprep.subr.mxu0 0.0
        %875 = vmatpush1.msra.mxu0 0.0
        %876 = vmatprep.subr.mxu0 0.0
        %877 = vmatpush1.msra.mxu0 0.0
        %878 = vmatprep.mubr.f32.mxu0 0.0
        %879 = vmatmul.mubr.f32.gmra.mrb[0].mxu0 %v536
        %v880 = vpop.f32.mrb[0].mxu0
        %v881 = vadd.f32 0.0, %v880
        %v882 = vpop.f32.mrb[0].mxu0
        %v883 = vadd.f32 0.0, %v882
        %884 = vmatprep.mubr.f32.mxu0 0.0
        %885 = vmatmul.mubr.f32.gmra.mrb[0].mxu0 %v539
        %v886 = vpop.f32.mrb[0].mxu0
        %v887 = vadd.f32 0.0, %v886
        %v888 = vpop.f32.mrb[0].mxu0
        %v889 = vadd.f32 0.0, %v888
        %890 = vmatprep.mubr.f32.mxu0 0.0
        %891 = vmatmul.mubr.f32.gmra.mrb[0].mxu0 %v542
        %v892 = vpop.f32.mrb[0].mxu0
        %v893 = vadd.f32 0.0, %v892
        %v894 = vpop.f32.mrb[0].mxu0
        %v895 = vadd.f32 0.0, %v894
        %896 = vmatprep.mubr.f32.mxu0 0.0
        %897 = vmatmul.mubr.f32.gmra.mrb[0].mxu0 %v545
        %v898 = vpop.f32.mrb[0].mxu0
        %v899 = vadd.f32 0.0, %v898
        %v900 = vpop.f32.mrb[0].mxu0
        %v901 = vadd.f32 0.0, %v900
        %902 = vdwg.mxu0
        %v903 = vmul.f32 %v614, 0.2
        %v904 = vmul.f32 %v616, 0.2
        %v905 = vmul.f32 %v703, 0.2
        %v906 = vmul.f32 %v705, 0.2
        %v907 = vmul.f32 %v792, 0.2
        %v908 = vmul.f32 %v794, 0.2
        %v909 = vmul.f32 %v881, 0.2
        %v910 = vmul.f32 %v883, 0.2
        %v911 = vmul.f32 %v620, 0.2
        %v912 = vmul.f32 %v622, 0.2
        %v913 = vmul.f32 %v709, 0.2
        %v914 = vmul.f32 %v711, 0.2
        %v915 = vmul.f32 %v798, 0.2
        %v916 = vmul.f32 %v800, 0.2
        %v917 = vmul.f32 %v887, 0.2
        %v918 = vmul.f32 %v889, 0.2
        %v919 = vmul.f32 %v626, 0.2
        %v920 = vmul.f32 %v628, 0.2
        %v921 = vmul.f32 %v715, 0.2
        %v922 = vmul.f32 %v717, 0.2
        %v923 = vmul.f32 %v804, 0.2
        %v924 = vmul.f32 %v806, 0.2
        %v925 = vmul.f32 %v893, 0.2
        %v926 = vmul.f32 %v895, 0.2
        %v927 = vmul.f32 %v632, 0.2
        %v928 = vmul.f32 %v634, 0.2
        %v929 = vmul.f32 %v721, 0.2
        %v930 = vmul.f32 %v723, 0.2
        %v931 = vmul.f32 %v810, 0.2
        %v932 = vmul.f32 %v812, 0.2
        %v933 = vmul.f32 %v899, 0.2
        %v934 = vmul.f32 %v901, 0.2
        %v935 = vmax.f32 %v614, %v903
        %v936 = vmax.f32 %v616, %v904
        %v937 = vmax.f32 %v703, %v905
        %v938 = vmax.f32 %v705, %v906
        %v939 = vmax.f32 %v792, %v907
        %v940 = vmax.f32 %v794, %v908
        %v941 = vmax.f32 %v881, %v909
        %v942 = vmax.f32 %v883, %v910
        %v943 = vmax.f32 %v620, %v911
        %v944 = vmax.f32 %v622, %v912
        %v945 = vmax.f32 %v709, %v913
        %v946 = vmax.f32 %v711, %v914
        %v947 = vmax.f32 %v798, %v915
        %v948 = vmax.f32 %v800, %v916
        %v949 = vmax.f32 %v887, %v917
        %v950 = vmax.f32 %v889, %v918
        %v951 = vmax.f32 %v626, %v919
        %v952 = vmax.f32 %v628, %v920
        %v953 = vmax.f32 %v715, %v921
        %v954 = vmax.f32 %v717, %v922
        %v955 = vmax.f32 %v804, %v923
        %v956 = vmax.f32 %v806, %v924
        %v957 = vmax.f32 %v893, %v925
        %v958 = vmax.f32 %v895, %v926
        %v959 = vmax.f32 %v632, %v927
        %v960 = vmax.f32 %v634, %v928
        %v961 = vmax.f32 %v721, %v929
        %v962 = vmax.f32 %v723, %v930
        %v963 = vmax.f32 %v810, %v931
        %v964 = vmax.f32 %v812, %v932
        %v965 = vmax.f32 %v899, %v933
        %v966 = vmax.f32 %v901, %v934
        %967 = vst [vmem:[%s206] sm:$0xff] %v935
        %968 = vst [vmem:[%s206 + $0x8] sm:$0xff] %v936
        %969 = vst [vmem:[%s206 + $0x10] sm:$0xff] %v937
        %970 = vst [vmem:[%s206 + $0x18] sm:$0xff] %v938
        %971 = vst [vmem:[%s206 + $0x20] sm:$0xff] %v939
        %972 = vst [vmem:[%s206 + $0x28] sm:$0xff] %v940
        %973 = vst [vmem:[%s206 + $0x30] sm:$0xff] %v941
        %974 = vst [vmem:[%s206 + $0x38] sm:$0xff] %v942
        %975 = vst [vmem:[%s206 + $0x40] sm:$0xff] %v943
        %976 = vst [vmem:[%s206 + $0x48] sm:$0xff] %v944
        %977 = vst [vmem:[%s206 + $0x50] sm:$0xff] %v945
        %978 = vst [vmem:[%s206 + $0x58] sm:$0xff] %v946
        %979 = vst [vmem:[%s206 + $0x60] sm:$0xff] %v947
        %980 = vst [vmem:[%s206 + $0x68] sm:$0xff] %v948
        %981 = vst [vmem:[%s206 + $0x70] sm:$0xff] %v949
        %982 = vst [vmem:[%s206 + $0x78] sm:$0xff] %v950
        %983 = vst [vmem:[%s206 + $0x80] sm:$0xff] %v951
        %984 = vst [vmem:[%s206 + $0x88] sm:$0xff] %v952
        %985 = vst [vmem:[%s206 + $0x90] sm:$0xff] %v953
        %986 = vst [vmem:[%s206 + $0x98] sm:$0xff] %v954
        %987 = vst [vmem:[%s206 + $0xa0] sm:$0xff] %v955
        %988 = vst [vmem:[%s206 + $0xa8] sm:$0xff] %v956
        %989 = vst [vmem:[%s206 + $0xb0] sm:$0xff] %v957
        %990 = vst [vmem:[%s206 + $0xb8] sm:$0xff] %v958
        %991 = vst [vmem:[%s206 + $0xc0] sm:$0xff] %v959
        %992 = vst [vmem:[%s206 + $0xc8] sm:$0xff] %v960
        %993 = vst [vmem:[%s206 + $0xd0] sm:$0xff] %v961
        %994 = vst [vmem:[%s206 + $0xd8] sm:$0xff] %v962
        %995 = vst [vmem:[%s206 + $0xe0] sm:$0xff] %v963
        %996 = vst [vmem:[%s206 + $0xe8] sm:$0xff] %v964
        %997 = vst [vmem:[%s206 + $0xf0] sm:$0xff] %v965
        %998 = vst [vmem:[%s206 + $0xf8] sm:$0xff] %v966
        %s999 = sand.u32 %s112, 1
        %s1000 = scalar_lea.sflag [#allocation4], %s999
        %s1001 = sand.u32 %s112, 1
        %s1002 = smul.addr %s1001, 256
        %s1003 = scalar_lea.vmem [#allocation5], %s1002
        // Predicated region
        $region37: #{tpu_custom_call.1} parent=31 // pred_check
          %p1004 = pneg %p122
        $region38: #{tpu_custom_call.1} parent=31 // pred_check_branch
          %1006 = sbr.rel (%p1004) target = $region40
        $region39: #{tpu_custom_call.1} parent=31 // pred_region
          %s1007 = smul.u32 8, %s25
          %s1009 = ssub.s32 4096, 4096
          %1010 = vsyncadd %s1000, %s1009
          %s1011 = smul.addr %s24, 32
          %s1012 = sadd.s32 %s1007, %s1011
          %s1013 = smul.addr %s1012, 128
          %s1014 = scalar_lea.hbm %s3, %s1013
          %s1015 = sshll.u32 %s1003, 4
          %s1016 = int_to_ptr.vmem [resolvable:$true] %s1015
          %1021 = dma.vmem_to_hbm [thread:$0]  %s1016, 4096, %s1014, %s1000, 1024, 1024, 64
        $region40: #{tpu_custom_call.1} parent=31 // pred_fallthru
          _
      $region32: #{tpu_custom_call.1} parent=5 // pred_fallthru
        _
      %p1022 = scmp.le.s32.totalorder 2, %s15
      // Predicated region
      $region41: #{tpu_custom_call.1} parent=5 // pred_check
        %p1023 = pneg %p1022
      $region42: #{tpu_custom_call.1} parent=5 // pred_check_branch
        %1025 = sbr.rel (%p1023) target = $region44
      $region43: #{tpu_custom_call.1} parent=5 // pred_region
        %s1026 = ssub.s32 %s15, 2
        // Predicated region
        $region45: #{tpu_custom_call.1} parent=43 // pred_check
          %p1027 = pneg %p128
        $region46: #{tpu_custom_call.1} parent=43 // pred_check_branch
          %1029 = sbr.rel (%p1027) target = $region48
        $region47: #{tpu_custom_call.1} parent=43 // pred_region
          %s1030 = sand.u32 %s113, 1
          %s1031 = scalar_lea.sflag [#allocation4], %s1030
          %s1032 = sand.u32 %s113, 1
          %s1033 = smul.addr %s1032, 256
          %s1034 = scalar_lea.vmem [#allocation5], %s1033
          %1035 = dma.done %s1031, 4096
        $region48: #{tpu_custom_call.1} parent=43 // pred_fallthru
          _
      $region44: #{tpu_custom_call.1} parent=5 // pred_fallthru
        _
    $region6: #{tpu_custom_call.1} parent=1 // loop_footer
      %s19 = sadd.s32 1, %s15
    $region7: #{tpu_custom_call.1} parent=1 // loop_footer_branch
      %14 = sbr.rel target = $region3
    $region8: #{tpu_custom_call.1} parent=1 // loop_exit
      _
    %1036 = vsyncpa [#allocation3], 1
    %s1037 = scalar_lea.sflag [#allocation3], 1
    %1038 = vsyncpa %s1037, 1
    %1039 = vsyncpa [#allocation4], 1
    %s1040 = scalar_lea.sflag [#allocation4], 1
    %1041 = vsyncpa %s1040, 1

</llo_original>
